<compile_context>
chip_gen: v7x
topology: tpu7x:2x2x1
jax: 0.10.0
libtpu: 0.0.40
codegen_flags: <defaults>
</compile_context>

<pallas_src>
import functools

import jax
import jax.numpy as jnp
from jax.experimental import pallas as pl
from jax.experimental.pallas import tpu as pltpu

_NEG_BIG = -1e30  # finite "minus infinity" (avoids NaN in exp(m_old - m_new))


def _infonce_kernel(a_ref, bcols_ref, bdiag_ref, rowloss_ref, m_ref, l_ref, *,
                    inv_temp, valid_b, block_rows, block_cols,
                    needs_col_mask, needs_row_mask):
    """One (row-tile i, column-tile j) step of the online-logsumexp InfoNCE.

    a_ref:       (block_rows, Dp) rows [i*block_rows, ...) of chunk1
    bcols_ref:   (block_cols, Dp) rows [j*block_cols, ...) of chunk2 (stream)
    bdiag_ref:   (block_rows, Dp) rows [i*block_rows, ...) of chunk2 (diag),
                 resident across the whole j axis (index map depends on i only)
    rowloss_ref: (block_rows, 1) per-row loss, written on the last column step
    m_ref/l_ref: (block_rows, 1) f32 scratch (running max / running exp-sum),
                 persistent across the j (reduction) axis.
    """
    i = pl.program_id(0)
    j = pl.program_id(1)
    last_col = pl.num_programs(1) - 1

    @pl.when(j == 0)
    def _init():
        m_ref[...] = jnp.full_like(m_ref, _NEG_BIG)
        l_ref[...] = jnp.zeros_like(l_ref)

    a = a_ref[...]

    # (block_rows, block_cols) logits on the MXU: contract over D directly
    # (no in-kernel transpose), accumulate in f32, one multiply for 1/T.
    sim = jax.lax.dot_general(
        a, bcols_ref[...],
        dimension_numbers=(((1,), (1,)), ((), ())),
        preferred_element_type=jnp.float32) * inv_temp

    def lse_update(s):
        m_prev = m_ref[...]
        m_new = jnp.maximum(m_prev, jnp.max(s, axis=-1, keepdims=True))
        l_ref[...] = (l_ref[...] * jnp.exp(m_prev - m_new)
                      + jnp.sum(jnp.exp(s - m_new), axis=-1, keepdims=True))
        m_ref[...] = m_new

    if needs_col_mask:
        # Padding is always < one column tile, so only the final column tile
        # can contain invalid columns: mask only there.
        @pl.when(j == last_col)
        def _masked():
            col = (jax.lax.broadcasted_iota(jnp.int32, sim.shape, 1)
                   + j * block_cols)
            lse_update(jnp.where(col < valid_b, sim, _NEG_BIG))

        @pl.when(j != last_col)
        def _unmasked():
            lse_update(sim)
    else:
        lse_update(sim)

    @pl.when(j == last_col)
    def _finalize():
        # Positive (diagonal) logits: diag(a @ b.T) == sum(a * b, -1), using the
        # row-matched chunk2 block.  Products promoted to f32 so the diag path
        # matches the MXU's f32 accumulation semantics.
        diag = jnp.sum(
            a.astype(jnp.float32) * bdiag_ref[...].astype(jnp.float32),
            axis=-1, keepdims=True) * inv_temp
        per_row = m_ref[...] + jnp.log(l_ref[...]) - diag
        if needs_row_mask:
            row = (jax.lax.broadcasted_iota(jnp.int32, per_row.shape, 0)
                   + i * block_rows)
            per_row = jnp.where(row < valid_b, per_row, 0.0)
        rowloss_ref[...] = per_row


def _round_up(x, m):
    return (x + m - 1) // m * m


def _cdiv(a, b):
    return -(-a // b)


def _vmem_capacity_bytes():
    """Per-core VMEM capacity; falls back to the smallest modern value (v7x)."""
    try:
        info = pltpu.get_tpu_info()
        cap = getattr(info, "vmem_capacity_bytes", None)
        if cap:
            return int(cap)
    except Exception:
        pass
    return 64 * 1024 * 1024


def _choose_tiles(B, D_pad, in_bytes, block_rows, block_cols, vmem_budget):
    B8 = _round_up(max(B, 1), 8)

    if block_rows is None:
        block_rows = min(256, B8)
        if B8 >= 16:
            # Guarantee >= 2 row tiles when possible so the "parallel" axis
            # shards across both v7x TensorCores.
            block_rows = min(block_rows, _round_up(_cdiv(B8, 2), 8))
        # D-aware shrink: keep the fixed per-step buffers (a + diag copy,
        # double-buffered, plus at least one column tile) inside the budget.
        while block_rows > 8 and (6 * block_rows * D_pad * in_bytes
                                  + 16 * block_rows * block_rows) > vmem_budget:
            block_rows = max(8, _round_up(block_rows // 2, 8))
    block_rows = _round_up(block_rows, 8)

    B_pad_r = _round_up(B, block_rows)
    n_row_tiles = B_pad_r // block_rows

    if block_cols is None:
        # VMEM model (per grid step):
        #   a + b_diag tiles, double buffered      -> fixed
        #   chunk2 column tile, double buffered    -> per block_rows of columns
        #   ~4 f32 temporaries of the logits tile  -> per block_rows of columns
        fixed = 4 * block_rows * D_pad * in_bytes
        per_c = 2 * block_rows * D_pad * in_bytes + 16 * block_rows * block_rows
        c_vmem = max(1, (vmem_budget - fixed) // per_c)
        c_size = max(1, 2048 // block_rows)      # keep the logits tile sane
        c = int(min(c_vmem, c_size, n_row_tiles))
        n_col_tiles = _cdiv(n_row_tiles, c)
        c = _cdiv(n_row_tiles, n_col_tiles)      # rebalance (less col padding)
        block_cols = c * block_rows
    block_cols = _round_up(block_cols, 8)
    B_pad_c = _round_up(B, block_cols)

    return block_rows, block_cols, B_pad_r, B_pad_c


def infonce_loss(chunk1_embedding_norm, chunk2_embedding_norm, temperature=0.1,
                 block_rows=None, block_cols=None, mxu_dtype=None):
    """Matches PyTorch InfoNCELoss.forward (mean cross-entropy vs arange)."""
    B, D = chunk1_embedding_norm.shape
    assert chunk2_embedding_norm.shape == (B, D)

    a = chunk1_embedding_norm
    b = chunk2_embedding_norm
    if mxu_dtype is not None and a.dtype != jnp.dtype(mxu_dtype):
        # Cast in the wrapper (fuses with the pad below): halves both the HBM
        # stream and the MXU cost; softmax/diag math stays f32 in the kernel.
        a = a.astype(mxu_dtype)
        b = b.astype(mxu_dtype)

    in_bytes = jnp.dtype(a.dtype).itemsize
    D_pad = _round_up(D, 128)          # lane-dense last dim for the MXU/DMA

    vmem_cap = _vmem_capacity_bytes()
    vmem_budget = int(vmem_cap * 0.65)               # tile working-set target
    vmem_limit = min(int(vmem_cap * 0.8), 128 * 1024 * 1024)

    block_rows, block_cols, B_pad_r, B_pad_c = _choose_tiles(
        B, D_pad, in_bytes, block_rows, block_cols, vmem_budget)

    def pad_to(x, rows):
        if (rows, D_pad) == (B, D):
            return x
        return jnp.pad(x, ((0, rows - B), (0, D_pad - D)))

    a_p = pad_to(a, B_pad_r)
    bdiag_p = pad_to(b, B_pad_r)       # row-matched chunk2 copy for diag
    bcols_p = pad_to(b, B_pad_c)       # column-streamed chunk2 copy

    n_row_tiles = B_pad_r // block_rows
    n_col_tiles = B_pad_c // block_cols
    needs_col_mask = B_pad_c != B      # D zero-padding needs no mask
    needs_row_mask = B_pad_r != B

    kernel = functools.partial(
        _infonce_kernel,
        inv_temp=float(1.0 / temperature),
        valid_b=B,
        block_rows=block_rows,
        block_cols=block_cols,
        needs_col_mask=needs_col_mask,
        needs_row_mask=needs_row_mask,
    )

    cost = pl.CostEstimate(
        flops=int(2 * B_pad_r * B_pad_c * D_pad + 2 * B_pad_r * D_pad),
        transcendentals=int(B_pad_r * B_pad_c + 2 * B_pad_r),
        bytes_accessed=int((2 * B_pad_r + n_row_tiles * B_pad_c)
                           * D_pad * in_bytes + B_pad_r * 4),
    )

    per_row_loss = pl.pallas_call(
        kernel,
        out_shape=jax.ShapeDtypeStruct((B_pad_r, 1), jnp.float32),
        grid=(n_row_tiles, n_col_tiles),
        in_specs=[
            pl.BlockSpec((block_rows, D_pad), lambda i, j: (i, 0)),  # chunk1
            pl.BlockSpec((block_cols, D_pad), lambda i, j: (j, 0)),  # chunk2 cols
            pl.BlockSpec((block_rows, D_pad), lambda i, j: (i, 0)),  # chunk2 diag
        ],
        out_specs=pl.BlockSpec((block_rows, 1), lambda i, j: (i, 0)),
        scratch_shapes=[
            pltpu.VMEM((block_rows, 1), jnp.float32),  # running row max
            pltpu.VMEM((block_rows, 1), jnp.float32),  # running exp-sum
        ],
        compiler_params=pltpu.CompilerParams(
            dimension_semantics=("parallel", "arbitrary"),
            vmem_limit_bytes=vmem_limit),
        cost_estimate=cost,
    )(a_p, bcols_p, bdiag_p)

    return jnp.sum(per_row_loss) / jnp.float32(B)


def _reference_loss(c1, c2, temperature):
    sim = (c1.astype(jnp.float32) @ c2.astype(jnp.float32).T) / temperature
    return jnp.mean(
        jax.scipy.special.logsumexp(sim, axis=-1) - jnp.diagonal(sim))


if __name__ == "__main__":
    key = jax.random.PRNGKey(0)
    temperature = 0.1
    k1, k2, k3, k4, k5, k6 = jax.random.split(key, 6)

    # --- case 1: small batch, single tile (B=8, D=32) -----------------------
    B, D = 8, 32
    c1 = jax.random.normal(k1, (B, D), dtype=jnp.float32)
    c2 = jax.random.normal(k2, (B, D), dtype=jnp.float32)
    c1 = c1 / jnp.linalg.norm(c1, axis=-1, keepdims=True)
    c2 = c2 / jnp.linalg.norm(c2, axis=-1, keepdims=True)

    loss = infonce_loss(c1, c2, temperature=temperature)
    jax.block_until_ready(loss)
    ref = _reference_loss(c1, c2, temperature)
    assert jnp.allclose(loss, ref, atol=1e-4, rtol=1e-4), (loss, ref)

    # --- case 2: decoupled multi-tile grid with ragged row & column padding -
    B2, D2 = 20, 40
    d1 = jax.random.normal(k3, (B2, D2), dtype=jnp.float32)
    d2 = jax.random.normal(k4, (B2, D2), dtype=jnp.float32)
    d1 = d1 / jnp.linalg.norm(d1, axis=-1, keepdims=True)
    d2 = d2 / jnp.linalg.norm(d2, axis=-1, keepdims=True)

    loss2 = infonce_loss(d1, d2, temperature=temperature,
                         block_rows=8, block_cols=16)
    jax.block_until_ready(loss2)
    ref2 = _reference_loss(d1, d2, temperature)
    assert jnp.allclose(loss2, ref2, atol=1e-4, rtol=1e-4), (loss2, ref2)

    # --- case 3: bf16 MXU operands (f32 softmax/diag), auto tiles -----------
    B3, D3 = 24, 48
    e1 = jax.random.normal(k5, (B3, D3), dtype=jnp.float32)
    e2 = jax.random.normal(k6, (B3, D3), dtype=jnp.float32)
    e1 = e1 / jnp.linalg.norm(e1, axis=-1, keepdims=True)
    e2 = e2 / jnp.linalg.norm(e2, axis=-1, keepdims=True)

    loss3 = infonce_loss(e1, e2, temperature=temperature,
                         mxu_dtype=jnp.bfloat16)
    jax.block_until_ready(loss3)
    ref3 = _reference_loss(e1.astype(jnp.bfloat16).astype(jnp.float32),
                           e2.astype(jnp.bfloat16).astype(jnp.float32),
                           temperature)
    assert jnp.allclose(loss3, ref3, atol=1e-3, rtol=1e-3), (loss3, ref3)

    print("KERNEL_OK")
</pallas_src>

<mosaic_0001>
module attributes {stable_mosaic.version = 11 : i64} {
  func.func @_infonce_kernel(%arg0: i32, %arg1: i32, %arg2: memref<8x128xf32, #tpu.memory_space<vmem>>, %arg3: memref<8x128xf32, #tpu.memory_space<vmem>>, %arg4: memref<8x128xf32, #tpu.memory_space<vmem>>, %arg5: memref<8x1xf32, #tpu.memory_space<vmem>>, %arg6: memref<8x1xf32, #tpu.memory_space<vmem>>, %arg7: memref<8x1xf32, #tpu.memory_space<vmem>>) attributes {dimension_semantics = [#tpu.dimension_semantics<parallel>, #tpu.dimension_semantics<arbitrary>], iteration_bounds = array<i64: 1, 1>, scalar_prefetch = 0 : i64, scratch_operands = 2 : i64, tpu.core_type = #tpu.core_type<tc>, window_params = [{transform_indices = @transform_0, window_bounds = array<i64: 8, 128>}, {transform_indices = @transform_1, window_bounds = array<i64: 8, 128>}, {transform_indices = @transform_2, window_bounds = array<i64: 8, 128>}, {transform_indices = @transform_3, window_bounds = array<i64: 8, 1>}]} {
    %c0_i32 = arith.constant 0 : i32
    %0 = arith.cmpi eq, %arg1, %c0_i32 : i32
    %1 = arith.extui %0 : i1 to i32
    %c0_i32_0 = arith.constant 0 : i32
    %2 = arith.cmpi ne, %1, %c0_i32_0 : i32
    scf.if %2 {
      %cst_17 = arith.constant -1.000000e+30 : f32
      %27 = vector.broadcast %cst_17 : f32 to vector<8x1xf32>
      %c0_18 = arith.constant 0 : index
      %c0_19 = arith.constant 0 : index
      %28 = vector.load %arg6[%c0_18, %c0_19] : memref<8x1xf32, #tpu.memory_space<vmem>>, vector<8x1xf32>
      tpu.vector_store %arg6[%c0_18, %c0_19], %27 {strides = array<i32>} : memref<8x1xf32, #tpu.memory_space<vmem>>, vector<8x1xf32>,
      %cst_20 = arith.constant 0.000000e+00 : f32
      %29 = vector.broadcast %cst_20 : f32 to vector<8x1xf32>
      %c0_21 = arith.constant 0 : index
      %c0_22 = arith.constant 0 : index
      %30 = vector.load %arg7[%c0_21, %c0_22] : memref<8x1xf32, #tpu.memory_space<vmem>>, vector<8x1xf32>
      tpu.vector_store %arg7[%c0_21, %c0_22], %29 {strides = array<i32>} : memref<8x1xf32, #tpu.memory_space<vmem>>, vector<8x1xf32>,
    } else {
    }
    %c0 = arith.constant 0 : index
    %c0_1 = arith.constant 0 : index
    %3 = vector.load %arg2[%c0, %c0_1] : memref<8x128xf32, #tpu.memory_space<vmem>>, vector<8x128xf32>
    %c0_2 = arith.constant 0 : index
    %c0_3 = arith.constant 0 : index
    %4 = vector.load %arg3[%c0_2, %c0_3] : memref<8x128xf32, #tpu.memory_space<vmem>>, vector<8x128xf32>
    %cst = arith.constant dense<0.000000e+00> : vector<8x8xf32>
    %5 = tpu.matmul %3, %4, %cst {dimension_numbers = #tpu.dot_dimension_numbers<[1], [1], [0], [0], [0, 0, 1, 0], [], []>} : vector<8x128xf32>, vector<8x128xf32>, vector<8x8xf32> -> vector<8x8xf32>
    %cst_4 = arith.constant 1.000000e+01 : f32
    %6 = vector.broadcast %cst_4 : f32 to vector<8x8xf32>
    %7 = arith.mulf %5, %6 : vector<8x8xf32>
    %c0_5 = arith.constant 0 : index
    %c0_6 = arith.constant 0 : index
    %8 = vector.load %arg6[%c0_5, %c0_6] : memref<8x1xf32, #tpu.memory_space<vmem>>, vector<8x1xf32>
    %cst_7 = arith.constant dense<0xFF800000> : vector<8xf32>
    %9 = vector.multi_reduction <maximumf>, %7, %cst_7 [1] : vector<8x8xf32> to vector<8xf32>
    %10 = vector.shape_cast %9 : vector<8xf32> to vector<8x1xf32>
    %11 = arith.maximumf %8, %10 : vector<8x1xf32>
    %c0_8 = arith.constant 0 : index
    %c0_9 = arith.constant 0 : index
    %12 = vector.load %arg7[%c0_8, %c0_9] : memref<8x1xf32, #tpu.memory_space<vmem>>, vector<8x1xf32>
    %13 = arith.subf %8, %11 : vector<8x1xf32>
    %14 = math.exp %13 : vector<8x1xf32>
    %15 = arith.mulf %12, %14 : vector<8x1xf32>
    %16 = vector.broadcast %11 : vector<8x1xf32> to vector<8x8xf32>
    %17 = arith.subf %7, %16 : vector<8x8xf32>
    %18 = math.exp %17 : vector<8x8xf32>
    %cst_10 = arith.constant dense<0.000000e+00> : vector<8xf32>
    %19 = vector.multi_reduction <add>, %18, %cst_10 [1] : vector<8x8xf32> to vector<8xf32>
    %20 = vector.shape_cast %19 : vector<8xf32> to vector<8x1xf32>
    %21 = arith.addf %15, %20 : vector<8x1xf32>
    %c0_11 = arith.constant 0 : index
    %c0_12 = arith.constant 0 : index
    %22 = vector.load %arg7[%c0_11, %c0_12] : memref<8x1xf32, #tpu.memory_space<vmem>>, vector<8x1xf32>
    tpu.vector_store %arg7[%c0_11, %c0_12], %21 {strides = array<i32>} : memref<8x1xf32, #tpu.memory_space<vmem>>, vector<8x1xf32>,
    %c0_13 = arith.constant 0 : index
    %c0_14 = arith.constant 0 : index
    %23 = vector.load %arg6[%c0_13, %c0_14] : memref<8x1xf32, #tpu.memory_space<vmem>>, vector<8x1xf32>
    tpu.vector_store %arg6[%c0_13, %c0_14], %11 {strides = array<i32>} : memref<8x1xf32, #tpu.memory_space<vmem>>, vector<8x1xf32>,
    %c0_i32_15 = arith.constant 0 : i32
    %24 = arith.cmpi eq, %arg1, %c0_i32_15 : i32
    %25 = arith.extui %24 : i1 to i32
    %c0_i32_16 = arith.constant 0 : i32
    %26 = arith.cmpi ne, %25, %c0_i32_16 : i32
    scf.if %26 {
      %c0_17 = arith.constant 0 : index
      %c0_18 = arith.constant 0 : index
      %27 = vector.load %arg4[%c0_17, %c0_18] : memref<8x128xf32, #tpu.memory_space<vmem>>, vector<8x128xf32>
      %28 = arith.mulf %3, %27 : vector<8x128xf32>
      %cst_19 = arith.constant dense<0.000000e+00> : vector<8xf32>
      %29 = vector.multi_reduction <add>, %28, %cst_19 [1] : vector<8x128xf32> to vector<8xf32>
      %30 = vector.shape_cast %29 : vector<8xf32> to vector<8x1xf32>
      %cst_20 = arith.constant 1.000000e+01 : f32
      %31 = vector.broadcast %cst_20 : f32 to vector<8x1xf32>
      %32 = arith.mulf %30, %31 : vector<8x1xf32>
      %c0_21 = arith.constant 0 : index
      %c0_22 = arith.constant 0 : index
      %33 = vector.load %arg6[%c0_21, %c0_22] : memref<8x1xf32, #tpu.memory_space<vmem>>, vector<8x1xf32>
      %c0_23 = arith.constant 0 : index
      %c0_24 = arith.constant 0 : index
      %34 = vector.load %arg7[%c0_23, %c0_24] : memref<8x1xf32, #tpu.memory_space<vmem>>, vector<8x1xf32>
      %35 = math.log %34 : vector<8x1xf32>
      %36 = arith.addf %33, %35 : vector<8x1xf32>
      %37 = arith.subf %36, %32 : vector<8x1xf32>
      %c0_25 = arith.constant 0 : index
      %c0_26 = arith.constant 0 : index
      %38 = vector.load %arg5[%c0_25, %c0_26] : memref<8x1xf32, #tpu.memory_space<vmem>>, vector<8x1xf32>
      tpu.vector_store %arg5[%c0_25, %c0_26], %37 {strides = array<i32>} : memref<8x1xf32, #tpu.memory_space<vmem>>, vector<8x1xf32>,
    } else {
    }
    return
  }
  func.func @transform_0(%arg0: i32, %arg1: i32) -> (i32, i32) {
    %c0_i32 = arith.constant 0 : i32
    %c0_i32_0 = arith.constant 0 : i32
    return %arg0, %c0_i32 : i32, i32
  }
  func.func @transform_1(%arg0: i32, %arg1: i32) -> (i32, i32) {
    %c0_i32 = arith.constant 0 : i32
    %c0_i32_0 = arith.constant 0 : i32
    return %arg1, %c0_i32 : i32, i32
  }
  func.func @transform_2(%arg0: i32, %arg1: i32) -> (i32, i32) {
    %c0_i32 = arith.constant 0 : i32
    %c0_i32_0 = arith.constant 0 : i32
    return %arg0, %c0_i32 : i32, i32
  }
  func.func @transform_3(%arg0: i32, %arg1: i32) -> (i32, i32) {
    %c0_i32 = arith.constant 0 : i32
    %c0_i32_0 = arith.constant 0 : i32
    return %arg0, %c0_i32 : i32, i32
  }
}

</mosaic_0001>

<llo_original>
// kernel: tpu_custom_call.1
$region0: #{tpu_custom_call.1}
  #allocation0 [shape = 'u32[]', space=smem, size = 0x4, offset = 0x4, fixed_abs, tag = 'smem constant byte address 0x4 - core index']
  #allocation1 [shape = 'u32[144,128]{1,0:T(1,128)}', space=vmem, size = 0x12000, scoped, tag = 'internal scratch']
  #allocation2 [shape = 'f32[8,1]{1,0:T(8,128)}', space=vmem, size = 0x1000, scoped, tag = 'scratch operand']
  #allocation3 [shape = 'f32[8,1]{1,0:T(8,128)}', space=vmem, size = 0x1000, scoped, tag = 'scratch operand']
  %s0 = inlined_call_operand.hbm [shape: f32[8,128], index: 0, kind: input, shape index: {}]
  %s1 = inlined_call_operand.hbm [shape: f32[8,128], index: 1, kind: input, shape index: {}]
  %s2 = inlined_call_operand.hbm [shape: f32[8,128], index: 2, kind: input, shape index: {}]
  %s3 = inlined_call_operand.vmem [shape: f32[8,1], index: 3, kind: output, shape index: {}]
  %s4 = sld [smem:[#allocation0]]
  $region42: #{tpu_custom_call.1} parent=0
    _
  %s6 = ssub.s32 1, %s4
  %s7 = scalar_select 0, %s6, %s4
  $region1: #{tpu_custom_call.1} parent=0
    #allocation4 [shape = 'u8[4096]{0}', space=vmem, size = 0x1000, scoped, tag = 'input window, operand 0, single buffered']
    #allocation5 [shape = 's32[1]{0}', space=sflag, size = 0x4, scoped, tag = 'scoped memory for tpu_custom_call.1']
    #allocation6 [shape = 'u8[4096]{0}', space=vmem, size = 0x1000, scoped, tag = 'input window, operand 1, single buffered']
    #allocation7 [shape = 's32[1]{0}', space=sflag, size = 0x4, scoped, tag = 'scoped memory for tpu_custom_call.1']
    #allocation8 [shape = 'u8[4096]{0}', space=vmem, size = 0x1000, scoped, tag = 'input window, operand 2, single buffered']
    %8 = vsyncpa [#allocation5], 0
    %9 = vsyncpa [#allocation7], 0
    // Predicated region
    $region2: #{tpu_custom_call.1} parent=1 // pred_check
      _
    $region3: #{tpu_custom_call.1} parent=1 // pred_check_branch
      %11 = sbr.rel (0) target = $region5
    $region4: #{tpu_custom_call.1} parent=1 // pred_region
      %s13 = ssub.s32 128, 128
      %14 = vsyncadd [#allocation5], %s13
      %s16 = sshll.u32 [#allocation4], 4
      %s17 = int_to_ptr.vmem [resolvable:$true] %s16
      %19 = dma.hbm_to_vmem [thread:$0]  %s0, 128, %s17, [#allocation5]
    $region5: #{tpu_custom_call.1} parent=1 // pred_fallthru
      _
    // Predicated region
    $region6: #{tpu_custom_call.1} parent=1 // pred_check
      _
    $region7: #{tpu_custom_call.1} parent=1 // pred_check_branch
      %21 = sbr.rel (0) target = $region9
    $region8: #{tpu_custom_call.1} parent=1 // pred_region
      %s23 = ssub.s32 128, 128
      %24 = vsyncadd [#allocation7], %s23
      %s26 = sshll.u32 [#allocation6], 4
      %s27 = int_to_ptr.vmem [resolvable:$true] %s26
      %29 = dma.hbm_to_vmem [thread:$0]  %s1, 128, %s27, [#allocation7]
    $region9: #{tpu_custom_call.1} parent=1 // pred_fallthru
      _
    // Predicated region
    $region10: #{tpu_custom_call.1} parent=1 // pred_check
      _
    $region11: #{tpu_custom_call.1} parent=1 // pred_check_branch
      %31 = sbr.rel (0) target = $region13
    $region12: #{tpu_custom_call.1} parent=1 // pred_region
      %s33 = ssub.s32 128, 128
      %34 = vsyncadd [#allocation7], %s33
      %s36 = sshll.u32 [#allocation8], 4
      %s37 = int_to_ptr.vmem [resolvable:$true] %s36
      %39 = dma.hbm_to_vmem [thread:$0]  %s2, 128, %s37, [#allocation7]
    $region13: #{tpu_custom_call.1} parent=1 // pred_fallthru
      _
    // Predicated region
    $region14: #{tpu_custom_call.1} parent=1 // pred_check
      _
    $region15: #{tpu_custom_call.1} parent=1 // pred_check_branch
      %41 = sbr.rel (0) target = $region17
    $region16: #{tpu_custom_call.1} parent=1 // pred_region
      %42 = dma.done [#allocation5], 128
    $region17: #{tpu_custom_call.1} parent=1 // pred_fallthru
      _
    // Predicated region
    $region18: #{tpu_custom_call.1} parent=1 // pred_check
      _
    $region19: #{tpu_custom_call.1} parent=1 // pred_check_branch
      %44 = sbr.rel (0) target = $region21
    $region20: #{tpu_custom_call.1} parent=1 // pred_region
      %45 = dma.done [#allocation7], 128
    $region21: #{tpu_custom_call.1} parent=1 // pred_fallthru
      _
    // Predicated region
    $region22: #{tpu_custom_call.1} parent=1 // pred_check
      _
    $region23: #{tpu_custom_call.1} parent=1 // pred_check_branch
      %47 = sbr.rel (0) target = $region25
    $region24: #{tpu_custom_call.1} parent=1 // pred_region
      %48 = dma.done [#allocation7], 128
    $region25: #{tpu_custom_call.1} parent=1 // pred_fallthru
      _
    %p49 = scmp.eq.s32.totalorder 0, 0
    // Predicated region
    $region26: #{tpu_custom_call.1} parent=1 // pred_check
      %p50 = pneg %p49
    $region27: #{tpu_custom_call.1} parent=1 // pred_check_branch
      %52 = sbr.rel (%p50) target = $region29
    $region28: #{tpu_custom_call.1} parent=1 // pred_region
      %vm53 = vcmask 7168
      %54 = vst.msk [vmem:[#allocation2] sm:$0xff] %vm53, -1e+30
      %55 = vst.msk [vmem:[#allocation3] sm:$0xff] %vm53, 0.0
    $region29: #{tpu_custom_call.1} parent=1 // pred_fallthru
      _
    %v56 = vld [vmem:[#allocation4] sm:$0xff]
    %v57 = vld [vmem:[#allocation6] sm:$0xff]
    %58 = vmatprep.subr.mxu0 0.0
    %59 = vmatpush1.xpose.msra.mxu0 %v57
    %60 = vmatprep.subr.mxu0 0.0
    %61 = vmatpush1.xpose.msra.mxu0 0.0
    %62 = vmatprep.subr.mxu0 0.0
    %63 = vmatpush1.xpose.msra.mxu0 0.0
    %64 = vmatprep.subr.mxu0 0.0
    %65 = vmatpush1.xpose.msra.mxu0 0.0
    %66 = vmatprep.subr.mxu0 0.0
    %67 = vmatpush1.xpose.msra.mxu0 0.0
    %68 = vmatprep.subr.mxu0 0.0
    %69 = vmatpush1.xpose.msra.mxu0 0.0
    %70 = vmatprep.subr.mxu0 0.0
    %71 = vmatpush1.xpose.msra.mxu0 0.0
    %72 = vmatprep.subr.mxu0 0.0
    %73 = vmatpush1.xpose.msra.mxu0 0.0
    %74 = vmatprep.subr.mxu0 0.0
    %75 = vmatpush1.xpose.msra.mxu0 0.0
    %76 = vmatprep.subr.mxu0 0.0
    %77 = vmatpush1.xpose.msra.mxu0 0.0
    %78 = vmatprep.subr.mxu0 0.0
    %79 = vmatpush1.xpose.msra.mxu0 0.0
    %80 = vmatprep.subr.mxu0 0.0
    %81 = vmatpush1.xpose.msra.mxu0 0.0
    %82 = vmatprep.subr.mxu0 0.0
    %83 = vmatpush1.xpose.msra.mxu0 0.0
    %84 = vmatprep.subr.mxu0 0.0
    %85 = vmatpush1.xpose.msra.mxu0 0.0
    %86 = vmatprep.subr.mxu0 0.0
    %87 = vmatpush1.xpose.msra.mxu0 0.0
    %88 = vmatprep.subr.mxu0 0.0
    %89 = vmatpush1.xpose.msra.mxu0 0.0
    %90 = vmatprep.subr.mxu0 0.0
    %91 = vmatpush1.xpose.msra.mxu0 0.0
    %92 = vmatprep.subr.mxu0 0.0
    %93 = vmatpush1.xpose.msra.mxu0 0.0
    %94 = vmatprep.subr.mxu0 0.0
    %95 = vmatpush1.xpose.msra.mxu0 0.0
    %96 = vmatprep.subr.mxu0 0.0
    %97 = vmatpush1.xpose.msra.mxu0 0.0
    %98 = vmatprep.subr.mxu0 0.0
    %99 = vmatpush1.xpose.msra.mxu0 0.0
    %100 = vmatprep.subr.mxu0 0.0
    %101 = vmatpush1.xpose.msra.mxu0 0.0
    %102 = vmatprep.subr.mxu0 0.0
    %103 = vmatpush1.xpose.msra.mxu0 0.0
    %104 = vmatprep.subr.mxu0 0.0
    %105 = vmatpush1.xpose.msra.mxu0 0.0
    %106 = vmatprep.subr.mxu0 0.0
    %107 = vmatpush1.xpose.msra.mxu0 0.0
    %108 = vmatprep.subr.mxu0 0.0
    %109 = vmatpush1.xpose.msra.mxu0 0.0
    %110 = vmatprep.subr.mxu0 0.0
    %111 = vmatpush1.xpose.msra.mxu0 0.0
    %112 = vmatprep.subr.mxu0 0.0
    %113 = vmatpush1.xpose.msra.mxu0 0.0
    %114 = vmatprep.subr.mxu0 0.0
    %115 = vmatpush1.xpose.msra.mxu0 0.0
    %116 = vmatprep.subr.mxu0 0.0
    %117 = vmatpush1.xpose.msra.mxu0 0.0
    %118 = vmatprep.subr.mxu0 0.0
    %119 = vmatpush1.xpose.msra.mxu0 0.0
    %120 = vmatprep.subr.mxu0 0.0
    %121 = vmatpush1.xpose.msra.mxu0 0.0
    %122 = vmatprep.mubr.f32.mxu0 0.0
    %123 = vmatmul.mubr.f32.gmra.mrb[0].mxu0 %v56
    %v124 = vpop.f32.mrb[0].mxu0
    %v125 = vadd.f32 0.0, %v124
    %v126 = vpop.f32.mrb[0].mxu0
    %127 = vdwg.mxu0
    %v128 = vmul.f32 %v125, 10.0
    %v129 = vld [vmem:[#allocation2] sm:$0xff]
    %vm130 = vcmask 64512
    %v131 = vsel %vm130, %v128, -inf
    %132 = vmax.xlane.f32.xlu0 %v131
    %v133 = vpop.xlane.xlu0 %132
    %v134 = vmax.f32 %v129, %v133
    %v135 = vld [vmem:[#allocation3] sm:$0xff]
    %v136 = vsub.f32 %v129, %v134
    %v137 = vmul.f32 %v136, 1.442695
    %v138 = vpow.pop %v137
    %v139 = vmul.f32 %v135, %v138
    %141 = vset.pattern.permute.xlu0 0
    %142 = vperm.xlu0 %141, %v134
    %v143 = vpop.permute.xlu0 %142
    %v145 = vsub.f32 %v128, %v143
    %v146 = vmul.f32 %v145, 1.442695
    %v147 = vpow.pop %v146
    %v148 = vsel %vm130, %v147, 0.0
    %149 = vadd.xlane.f32.xlu0 %v148
    %v150 = vpop.xlane.xlu0 %149
    %v151 = vadd.f32 %v139, %v150
    %vm152 = vcmask 7168
    %153 = vst.msk [vmem:[#allocation3] sm:$0xff] %vm152, %v151
    %154 = vst.msk [vmem:[#allocation2] sm:$0xff] %vm152, %v134
    // Predicated region
    $region30: #{tpu_custom_call.1} parent=1 // pred_check
      %p155 = pneg %p49
    $region31: #{tpu_custom_call.1} parent=1 // pred_check_branch
      %157 = sbr.rel (%p155) target = $region33
    $region32: #{tpu_custom_call.1} parent=1 // pred_region
      %v158 = vld [vmem:[#allocation8] sm:$0xff]
      %v159 = vmul.f32 %v56, %v158
      %160 = vadd.xlane.f32.xlu0 %v159
      %v161 = vpop.xlane.xlu0 %160
      %v162 = vmul.f32 %v161, 10.0
      %v163 = vld [vmem:[#allocation2] sm:$0xff]
      %v164 = vld [vmem:[#allocation3] sm:$0xff]
      %v165 = vlog2.pop %v164
      %v166 = vmul.f32 %v165, 0.6931472
      %v167 = vadd.f32 %v163, %v166
      %v168 = vsub.f32 %v167, %v162
      %169 = vst.msk [vmem:[%s3] sm:$0xff] %vm152, %v168
    $region33: #{tpu_custom_call.1} parent=1 // pred_fallthru
      _
    // Predicated region
    $region34: #{tpu_custom_call.1} parent=1 // pred_check
      _
    $region35: #{tpu_custom_call.1} parent=1 // pred_check_branch
      %171 = sbr.rel (0) target = $region37
    $region36: #{tpu_custom_call.1} parent=1 // pred_region
      _
    $region37: #{tpu_custom_call.1} parent=1 // pred_fallthru
      _
    // Predicated region
    $region38: #{tpu_custom_call.1} parent=1 // pred_check
      _
    $region39: #{tpu_custom_call.1} parent=1 // pred_check_branch
      %173 = sbr.rel (0) target = $region41
    $region40: #{tpu_custom_call.1} parent=1 // pred_region
      _
    $region41: #{tpu_custom_call.1} parent=1 // pred_fallthru
      _
    %174 = vsyncpa [#allocation5], 1
    %175 = vsyncpa [#allocation7], 1

</llo_original>
